<compile_context>
chip_gen: v7x
topology: tpu7x:2x2x1
jax: 0.10.0
libtpu: 0.0.40
codegen_flags: <defaults>
</compile_context>

<pallas_src>
import functools

import jax
import jax.numpy as jnp
from jax.experimental import pallas as pl
from jax.experimental.pallas import tpu as pltpu


def _pair(v):
    if isinstance(v, (tuple, list)):
        assert len(v) == 2
        return tuple(int(x) for x in v)
    return (int(v), int(v))


def _quadruple(v):
    if isinstance(v, (tuple, list)):
        assert len(v) == 4
        return tuple(int(x) for x in v)
    return (int(v),) * 4


# Paeth / Devillard median-of-9 selection network: 19 compare-exchanges.
# Each (a, b) means "ensure vals[a] <= vals[b]".  Result is wire 4.
_MED9_PAIRS = (
    (1, 2), (4, 5), (7, 8), (0, 1), (3, 4), (6, 7),
    (1, 2), (4, 5), (7, 8), (0, 3), (5, 8), (4, 7),
    (3, 6), (1, 4), (2, 5), (4, 7), (4, 2), (6, 4),
    (4, 2),
)


def _odd_even_pairs(n):
    """Full odd-even transposition sorting network for n wires."""
    pairs = []
    for stage in range(n):
        for i in range(stage % 2, n - 1, 2):
            pairs.append((i, i + 1))
    return tuple(pairs)


def _median_plan(n):
    """Comparator plan for the lower median of n values.

    Backward liveness from the result wire prunes comparators that cannot
    influence it and marks the surviving ones as one-sided (only min or only
    max needed) when the other output is never read again.
    """
    m = (n - 1) // 2
    pairs = _MED9_PAIRS if n == 9 else _odd_even_pairs(n)
    live = {m}
    plan_rev = []
    for a, b in reversed(pairs):
        need_lo = a in live
        need_hi = b in live
        if not (need_lo or need_hi):
            continue
        plan_rev.append((a, b, need_lo, need_hi))
        live.add(a)
        live.add(b)
    return tuple(reversed(plan_rev)), m


def _apply_median(vals, plan, med_idx):
    vals = list(vals)
    for a, b, need_lo, need_hi in plan:
        va, vb = vals[a], vals[b]
        if need_lo:
            vals[a] = jnp.minimum(va, vb)
        if need_hi:
            vals[b] = jnp.maximum(va, vb)
    return vals[med_idx]


def _median_pool_kernel(x_hbm, o_ref, buf, sem, *, cb, tile_h, tile_in_h,
                        rows_per_group, kh, kw, sh, sw, out_w, plan, med_idx):
    """One (channel-block, row-group, row-tile) step.

    x_hbm : (NC, Hp_g, Wp) full input, resident in HBM (pl.ANY).
    o_ref : (cb, tile_h, out_w) output block (auto-pipelined BlockSpec).
    buf   : (n_slots, cb, tile_in_h, Wp) VMEM scratch (manual double buffer).
    sem   : (n_slots,) DMA semaphores.
    """
    c = pl.program_id(0)
    g = pl.program_id(1)
    r = pl.program_id(2)
    row_tile = g * rows_per_group + r
    slot = (r % 2) if rows_per_group > 1 else 0

    def dma(tile_idx, s):
        return pltpu.make_async_copy(
            x_hbm.at[pl.ds(c * cb, cb),
                     pl.ds(tile_idx * (tile_h * sh), tile_in_h), :],
            buf.at[s], sem.at[s])

    if rows_per_group == 1:
        dma(row_tile, slot).start()
    else:
        @pl.when(r == 0)
        def _():
            dma(row_tile, slot).start()

        # Prefetch the next row tile of this group into the other slot while
        # the current one finishes / is being computed.
        @pl.when(r + 1 < rows_per_group)
        def _():
            dma(row_tile + 1, 1 - slot).start()

    dma(row_tile, slot).wait()

    cur = buf.at[slot]
    vals = []
    for dy in range(kh):
        rsl = (slice(dy, dy + tile_h) if sh == 1
               else pl.ds(dy, tile_h, stride=sh))
        for dx in range(kw):
            csl = (slice(dx, dx + out_w) if sw == 1
                   else pl.ds(dx, out_w, stride=sw))
            vals.append(cur[:, rsl, csl])

    med = _apply_median(vals, plan, med_idx)
    o_ref[...] = med.astype(o_ref.dtype)


def _vmem_capacity_bytes():
    try:
        info = pltpu.get_tpu_info()
        for name in ("vmem_capacity_bytes", "vmem_bytes", "vmem_size_bytes"):
            cap = getattr(info, name, None)
            if cap:
                return int(cap)
    except Exception:  # pragma: no cover - info query best-effort only
        pass
    return 64 * 1024 * 1024  # conservative (v7x-sized) default


def _largest_divisor_leq(n, cap):
    cap = max(1, min(n, cap))
    best = 1
    d = 1
    while d * d <= n:
        if n % d == 0:
            for cand in (d, n // d):
                if cand <= cap and cand > best:
                    best = cand
        d += 1
    return best


@functools.partial(jax.jit,
                   static_argnames=("kernel_size", "stride", "padding", "same"))
def median_pool2d(x, kernel_size=3, stride=1, padding=0, same=False):
    """Pallas-backed equivalent of MedianPool2d.forward (NCHW in / NCHW out)."""
    k = _pair(kernel_size)
    s = _pair(stride)
    pad4 = _quadruple(padding)
    kh, kw = k
    sh, sw = s
    kk = kh * kw

    N, C, H, W = x.shape
    NC = N * C

    if same:
        ph = max(kh - sh, 0) if H % sh == 0 else max(kh - H % sh, 0)
        pw = max(kw - sw, 0) if W % sw == 0 else max(kw - W % sw, 0)
        pad4 = (pw // 2, pw - pw // 2, ph // 2, ph - ph // 2)
    p_l, p_r, p_t, p_b = pad4

    # NCHW-native internal layout: (N*C, Hp, Wp), W on lanes.  No transposes.
    xr = x.reshape(NC, H, W)
    if any(pad4):
        # TODO(synk): fuse reflect padding into the kernel DMA offsets.
        xr = jnp.pad(xr, ((0, 0), (p_t, p_b), (p_l, p_r)), mode="reflect")
    Hp = H + p_t + p_b
    Wp = W + p_l + p_r
    out_h = (Hp - kh) // sh + 1
    out_w = (Wp - kw) // sw + 1

    itemsize = x.dtype.itemsize
    vmem_cap = _vmem_capacity_bytes()
    vmem_limit = min((vmem_cap * 3) // 4, 96 * 1024 * 1024)
    budget = (vmem_limit * 7) // 10

    def footprint(cb_, th_):
        tih = (th_ - 1) * sh + kh
        # double-buffered input scratch + pipelined output block + window-tap
        # temporaries (spill headroom).
        return itemsize * cb_ * (2 * tih * Wp + (kk + 6) * th_ * out_w)

    # Channel (leading-dim) block: a divisor of N*C, capped by the budget.
    cb_cap = 256
    min_th = min(8, max(1, out_h))
    while cb_cap > 1 and footprint(cb_cap, min_th) > budget:
        cb_cap //= 2
    cb = _largest_divisor_leq(NC, cb_cap)
    n_c_blocks = NC // cb

    # Output-row tile: whole plane if tiny, else a multiple of 8 chosen to fit
    # the budget while keeping the rounded-up padding waste small.
    if out_h < 16 and footprint(cb, out_h) <= budget:
        tile_h = out_h
    else:
        th_max = min(512, max(8, ((out_h + 1) // 2) // 8 * 8))
        while th_max > 8 and footprint(cb, th_max) > budget:
            th_max -= 8
        tile_h = th_max
        best = None
        th = th_max
        while th >= 8:
            waste = (-(-out_h // th)) * th - out_h
            key = (waste, -th)
            if best is None or key < best:
                best, tile_h = key, th
            if waste <= max(8, out_h // 8):
                break
            th -= 8

    n_row_tiles = -(-out_h // tile_h)
    # With a single channel block, split row tiles into 2 groups so v7x's two
    # TensorCores get a parallel axis (each group keeps its own prefetch chain).
    n_groups = 2 if (n_c_blocks == 1 and n_row_tiles >= 4) else 1
    n_row_tiles = (-(-n_row_tiles // n_groups)) * n_groups
    rows_per_group = n_row_tiles // n_groups
    out_h_g = n_row_tiles * tile_h
    tile_in_h = (tile_h - 1) * sh + kh

    # Rows needed if the grid computes out_h_g (>= out_h) output rows; pad the
    # bottom with edge values -- those rows only feed outputs that are sliced
    # away below.
    rows_needed = (out_h_g - 1) * sh + kh
    if rows_needed > Hp:
        xr = jnp.pad(xr, ((0, 0), (0, rows_needed - Hp), (0, 0)), mode="edge")

    plan, med_idx = _median_plan(kk)
    n_slots = 2 if rows_per_group > 1 else 1

    kernel = functools.partial(
        _median_pool_kernel, cb=cb, tile_h=tile_h, tile_in_h=tile_in_h,
        rows_per_group=rows_per_group, kh=kh, kw=kw, sh=sh, sw=sw,
        out_w=out_w, plan=plan, med_idx=med_idx)

    out = pl.pallas_call(
        kernel,
        out_shape=jax.ShapeDtypeStruct((NC, out_h_g, out_w), x.dtype),
        grid=(n_c_blocks, n_groups, rows_per_group),
        in_specs=[pl.BlockSpec(memory_space=pl.ANY)],
        out_specs=pl.BlockSpec(
            (cb, tile_h, out_w),
            lambda c, g, r: (c, g * rows_per_group + r, 0)),
        scratch_shapes=[
            pltpu.VMEM((n_slots, cb, tile_in_h, Wp), x.dtype),
            pltpu.SemaphoreType.DMA((n_slots,)),
        ],
        compiler_params=pltpu.CompilerParams(
            dimension_semantics=("parallel", "parallel", "arbitrary"),
            vmem_limit_bytes=int(vmem_limit)),
    )(xr)

    out = out[:, :out_h, :]
    return out.reshape(N, C, out_h, out_w)


def _reference_median_pool(x, kernel_size=3, stride=1, padding=0, same=False):
    """Pure-JAX reference (unfold + sort + lower median), for verification."""
    k = _pair(kernel_size)
    s = _pair(stride)
    pad4 = _quadruple(padding)
    N, C, H, W = x.shape
    if same:
        ph = max(k[0] - s[0], 0) if H % s[0] == 0 else max(k[0] - H % s[0], 0)
        pw = max(k[1] - s[1], 0) if W % s[1] == 0 else max(k[1] - W % s[1], 0)
        pad4 = (pw // 2, pw - pw // 2, ph // 2, ph - ph // 2)
    p_l, p_r, p_t, p_b = pad4
    xp = jnp.pad(x, ((0, 0), (0, 0), (p_t, p_b), (p_l, p_r)), mode="reflect") \
        if any(pad4) else x
    Hp, Wp = H + p_t + p_b, W + p_l + p_r
    oh = (Hp - k[0]) // s[0] + 1
    ow = (Wp - k[1]) // s[1] + 1
    patches = jnp.stack(
        [xp[:, :, dy:dy + (oh - 1) * s[0] + 1:s[0],
                  dx:dx + (ow - 1) * s[1] + 1:s[1]]
         for dy in range(k[0]) for dx in range(k[1])], axis=-1)
    srt = jnp.sort(patches, axis=-1)
    return srt[..., (k[0] * k[1] - 1) // 2]


if __name__ == "__main__":
    key = jax.random.PRNGKey(0)
    x = jax.random.normal(key, (2, 4, 16, 16), dtype=jnp.float32)

    # Default module config: kernel_size=3, stride=1, padding=0, same=False.
    out = median_pool2d(x, kernel_size=3, stride=1, padding=0, same=False)
    out = jax.block_until_ready(out)
    ref = _reference_median_pool(x, kernel_size=3, stride=1, padding=0,
                                 same=False)
    assert out.shape == (2, 4, 14, 14), out.shape
    assert jnp.allclose(out, ref), "mismatch vs reference (default config)"

    # 'same' padding path (reflect pad, output keeps 16x16).  This config also
    # exercises the row-tiled / double-buffered DMA path (2 row tiles).
    out_same = median_pool2d(x, kernel_size=3, stride=1, same=True)
    out_same = jax.block_until_ready(out_same)
    ref_same = _reference_median_pool(x, kernel_size=3, stride=1, same=True)
    assert out_same.shape == (2, 4, 16, 16), out_same.shape
    assert jnp.allclose(out_same, ref_same), "mismatch vs reference (same=True)"

    print("KERNEL_OK")
</pallas_src>

<mosaic_0001>
module attributes {stable_mosaic.version = 11 : i64} {
  func.func @_median_pool_kernel(%arg0: i32, %arg1: i32, %arg2: i32, %arg3: memref<8x16x16xf32, #tpu.memory_space<any>>, %arg4: memref<8x14x14xf32, #tpu.memory_space<vmem>>, %arg5: memref<1x8x16x16xf32, #tpu.memory_space<vmem>>, %arg6: memref<1x!tpu.dma_semaphore, #tpu.memory_space<semaphore_mem>>) attributes {dimension_semantics = [#tpu.dimension_semantics<parallel>, #tpu.dimension_semantics<parallel>, #tpu.dimension_semantics<arbitrary>], iteration_bounds = array<i64: 1, 1, 1>, scalar_prefetch = 0 : i64, scratch_operands = 2 : i64, tpu.core_type = #tpu.core_type<tc>, window_params = [{}, {transform_indices = @transform_1, window_bounds = array<i64: 8, 14, 14>}]} {
    %c1_i32 = arith.constant 1 : i32
    %0 = arith.muli %arg1, %c1_i32 : i32
    %1 = arith.addi %0, %arg2 : i32
    %c8_i32 = arith.constant 8 : i32
    %2 = arith.muli %arg0, %c8_i32 : i32
    %c14_i32 = arith.constant 14 : i32
    %3 = arith.muli %1, %c14_i32 : i32
    %c0_i32 = arith.constant 0 : i32
    %c0_i32_0 = arith.constant 0 : i32
    %c0_i32_1 = arith.constant 0 : i32
    %4 = tpu.memref_slice %arg3[%2, %3, %c0_i32_1] : memref<8x16x16xf32, #tpu.memory_space<any>> -> memref<8x16x16xf32, #tpu.memory_space<any>>
    %c0_i32_2 = arith.constant 0 : i32
    %c0_i32_3 = arith.constant 0 : i32
    %c0_i32_4 = arith.constant 0 : i32
    %5 = tpu.memref_slice %arg5[%c0_i32, %c0_i32_2, %c0_i32_3, %c0_i32_4] : memref<1x8x16x16xf32, #tpu.memory_space<vmem>> -> memref<1x8x16x16xf32, #tpu.memory_space<vmem>>
    %6 = tpu.memref_squeeze %5 : memref<1x8x16x16xf32, #tpu.memory_space<vmem>> -> memref<8x16x16xf32, #tpu.memory_space<vmem>>
    %7 = tpu.memref_slice %arg6[%c0_i32_0] : memref<1x!tpu.dma_semaphore, #tpu.memory_space<semaphore_mem>> -> memref<1x!tpu.dma_semaphore, #tpu.memory_space<semaphore_mem>>
    %8 = tpu.memref_squeeze %7 : memref<1x!tpu.dma_semaphore, #tpu.memory_space<semaphore_mem>> -> memref<!tpu.dma_semaphore, #tpu.memory_space<semaphore_mem>>
    tpu.enqueue_dma source(%4 : memref<8x16x16xf32, #tpu.memory_space<any>>) target(%6 : memref<8x16x16xf32, #tpu.memory_space<vmem>>) target_semaphore(%8 : memref<!tpu.dma_semaphore, #tpu.memory_space<semaphore_mem>>)
    %c8_i32_5 = arith.constant 8 : i32
    %9 = arith.muli %arg0, %c8_i32_5 : i32
    %c14_i32_6 = arith.constant 14 : i32
    %10 = arith.muli %1, %c14_i32_6 : i32
    %c0_i32_7 = arith.constant 0 : i32
    %c0_i32_8 = arith.constant 0 : i32
    %c0_i32_9 = arith.constant 0 : i32
    %11 = tpu.memref_slice %arg3[%9, %10, %c0_i32_9] : memref<8x16x16xf32, #tpu.memory_space<any>> -> memref<8x16x16xf32, #tpu.memory_space<any>>
    %c0_i32_10 = arith.constant 0 : i32
    %c0_i32_11 = arith.constant 0 : i32
    %c0_i32_12 = arith.constant 0 : i32
    %12 = tpu.memref_slice %arg5[%c0_i32_7, %c0_i32_10, %c0_i32_11, %c0_i32_12] : memref<1x8x16x16xf32, #tpu.memory_space<vmem>> -> memref<1x8x16x16xf32, #tpu.memory_space<vmem>>
    %13 = tpu.memref_squeeze %12 : memref<1x8x16x16xf32, #tpu.memory_space<vmem>> -> memref<8x16x16xf32, #tpu.memory_space<vmem>>
    %14 = tpu.memref_slice %arg6[%c0_i32_8] : memref<1x!tpu.dma_semaphore, #tpu.memory_space<semaphore_mem>> -> memref<1x!tpu.dma_semaphore, #tpu.memory_space<semaphore_mem>>
    %15 = tpu.memref_squeeze %14 : memref<1x!tpu.dma_semaphore, #tpu.memory_space<semaphore_mem>> -> memref<!tpu.dma_semaphore, #tpu.memory_space<semaphore_mem>>
    tpu.wait_dma2 semaphore(%15 : memref<!tpu.dma_semaphore, #tpu.memory_space<semaphore_mem>>) src(%11 : memref<8x16x16xf32, #tpu.memory_space<any>>) dst(%13 : memref<8x16x16xf32, #tpu.memory_space<vmem>>)
    %c0_i32_13 = arith.constant 0 : i32
    %c0_i32_14 = arith.constant 0 : i32
    %c0_i32_15 = arith.constant 0 : i32
    %c0_i32_16 = arith.constant 0 : i32
    %16 = tpu.memref_slice %arg5[%c0_i32_13, %c0_i32_14, %c0_i32_15, %c0_i32_16] : memref<1x8x16x16xf32, #tpu.memory_space<vmem>> -> memref<1x8x16x16xf32, #tpu.memory_space<vmem>>
    %17 = tpu.memref_squeeze %16 : memref<1x8x16x16xf32, #tpu.memory_space<vmem>> -> memref<8x16x16xf32, #tpu.memory_space<vmem>>
    %c0 = arith.constant 0 : index
    %c0_17 = arith.constant 0 : index
    %c0_18 = arith.constant 0 : index
    %18 = vector.load %17[%c0, %c0_17, %c0_18] : memref<8x16x16xf32, #tpu.memory_space<vmem>>, vector<8x14x14xf32>
    %c0_i32_19 = arith.constant 0 : i32
    %c0_i32_20 = arith.constant 0 : i32
    %c0_i32_21 = arith.constant 0 : i32
    %c0_i32_22 = arith.constant 0 : i32
    %19 = tpu.memref_slice %arg5[%c0_i32_19, %c0_i32_20, %c0_i32_21, %c0_i32_22] : memref<1x8x16x16xf32, #tpu.memory_space<vmem>> -> memref<1x8x16x16xf32, #tpu.memory_space<vmem>>
    %20 = tpu.memref_squeeze %19 : memref<1x8x16x16xf32, #tpu.memory_space<vmem>> -> memref<8x16x16xf32, #tpu.memory_space<vmem>>
    %c0_23 = arith.constant 0 : index
    %c0_24 = arith.constant 0 : index
    %c1 = arith.constant 1 : index
    %21 = vector.load %20[%c0_23, %c0_24, %c1] : memref<8x16x16xf32, #tpu.memory_space<vmem>>, vector<8x14x14xf32>
    %c0_i32_25 = arith.constant 0 : i32
    %c0_i32_26 = arith.constant 0 : i32
    %c0_i32_27 = arith.constant 0 : i32
    %c0_i32_28 = arith.constant 0 : i32
    %22 = tpu.memref_slice %arg5[%c0_i32_25, %c0_i32_26, %c0_i32_27, %c0_i32_28] : memref<1x8x16x16xf32, #tpu.memory_space<vmem>> -> memref<1x8x16x16xf32, #tpu.memory_space<vmem>>
    %23 = tpu.memref_squeeze %22 : memref<1x8x16x16xf32, #tpu.memory_space<vmem>> -> memref<8x16x16xf32, #tpu.memory_space<vmem>>
    %c0_29 = arith.constant 0 : index
    %c0_30 = arith.constant 0 : index
    %c2 = arith.constant 2 : index
    %24 = vector.load %23[%c0_29, %c0_30, %c2] : memref<8x16x16xf32, #tpu.memory_space<vmem>>, vector<8x14x14xf32>
    %c0_i32_31 = arith.constant 0 : i32
    %c0_i32_32 = arith.constant 0 : i32
    %c0_i32_33 = arith.constant 0 : i32
    %c0_i32_34 = arith.constant 0 : i32
    %25 = tpu.memref_slice %arg5[%c0_i32_31, %c0_i32_32, %c0_i32_33, %c0_i32_34] : memref<1x8x16x16xf32, #tpu.memory_space<vmem>> -> memref<1x8x16x16xf32, #tpu.memory_space<vmem>>
    %26 = tpu.memref_squeeze %25 : memref<1x8x16x16xf32, #tpu.memory_space<vmem>> -> memref<8x16x16xf32, #tpu.memory_space<vmem>>
    %c0_35 = arith.constant 0 : index
    %c1_36 = arith.constant 1 : index
    %c0_37 = arith.constant 0 : index
    %27 = vector.load %26[%c0_35, %c1_36, %c0_37] : memref<8x16x16xf32, #tpu.memory_space<vmem>>, vector<8x14x14xf32>
    %c0_i32_38 = arith.constant 0 : i32
    %c0_i32_39 = arith.constant 0 : i32
    %c0_i32_40 = arith.constant 0 : i32
    %c0_i32_41 = arith.constant 0 : i32
    %28 = tpu.memref_slice %arg5[%c0_i32_38, %c0_i32_39, %c0_i32_40, %c0_i32_41] : memref<1x8x16x16xf32, #tpu.memory_space<vmem>> -> memref<1x8x16x16xf32, #tpu.memory_space<vmem>>
    %29 = tpu.memref_squeeze %28 : memref<1x8x16x16xf32, #tpu.memory_space<vmem>> -> memref<8x16x16xf32, #tpu.memory_space<vmem>>
    %c0_42 = arith.constant 0 : index
    %c1_43 = arith.constant 1 : index
    %c1_44 = arith.constant 1 : index
    %30 = vector.load %29[%c0_42, %c1_43, %c1_44] : memref<8x16x16xf32, #tpu.memory_space<vmem>>, vector<8x14x14xf32>
    %c0_i32_45 = arith.constant 0 : i32
    %c0_i32_46 = arith.constant 0 : i32
    %c0_i32_47 = arith.constant 0 : i32
    %c0_i32_48 = arith.constant 0 : i32
    %31 = tpu.memref_slice %arg5[%c0_i32_45, %c0_i32_46, %c0_i32_47, %c0_i32_48] : memref<1x8x16x16xf32, #tpu.memory_space<vmem>> -> memref<1x8x16x16xf32, #tpu.memory_space<vmem>>
    %32 = tpu.memref_squeeze %31 : memref<1x8x16x16xf32, #tpu.memory_space<vmem>> -> memref<8x16x16xf32, #tpu.memory_space<vmem>>
    %c0_49 = arith.constant 0 : index
    %c1_50 = arith.constant 1 : index
    %c2_51 = arith.constant 2 : index
    %33 = vector.load %32[%c0_49, %c1_50, %c2_51] : memref<8x16x16xf32, #tpu.memory_space<vmem>>, vector<8x14x14xf32>
    %c0_i32_52 = arith.constant 0 : i32
    %c0_i32_53 = arith.constant 0 : i32
    %c0_i32_54 = arith.constant 0 : i32
    %c0_i32_55 = arith.constant 0 : i32
    %34 = tpu.memref_slice %arg5[%c0_i32_52, %c0_i32_53, %c0_i32_54, %c0_i32_55] : memref<1x8x16x16xf32, #tpu.memory_space<vmem>> -> memref<1x8x16x16xf32, #tpu.memory_space<vmem>>
    %35 = tpu.memref_squeeze %34 : memref<1x8x16x16xf32, #tpu.memory_space<vmem>> -> memref<8x16x16xf32, #tpu.memory_space<vmem>>
    %c0_56 = arith.constant 0 : index
    %c2_57 = arith.constant 2 : index
    %c0_58 = arith.constant 0 : index
    %36 = vector.load %35[%c0_56, %c2_57, %c0_58] : memref<8x16x16xf32, #tpu.memory_space<vmem>>, vector<8x14x14xf32>
    %c0_i32_59 = arith.constant 0 : i32
    %c0_i32_60 = arith.constant 0 : i32
    %c0_i32_61 = arith.constant 0 : i32
    %c0_i32_62 = arith.constant 0 : i32
    %37 = tpu.memref_slice %arg5[%c0_i32_59, %c0_i32_60, %c0_i32_61, %c0_i32_62] : memref<1x8x16x16xf32, #tpu.memory_space<vmem>> -> memref<1x8x16x16xf32, #tpu.memory_space<vmem>>
    %38 = tpu.memref_squeeze %37 : memref<1x8x16x16xf32, #tpu.memory_space<vmem>> -> memref<8x16x16xf32, #tpu.memory_space<vmem>>
    %c0_63 = arith.constant 0 : index
    %c2_64 = arith.constant 2 : index
    %c1_65 = arith.constant 1 : index
    %39 = vector.load %38[%c0_63, %c2_64, %c1_65] : memref<8x16x16xf32, #tpu.memory_space<vmem>>, vector<8x14x14xf32>
    %c0_i32_66 = arith.constant 0 : i32
    %c0_i32_67 = arith.constant 0 : i32
    %c0_i32_68 = arith.constant 0 : i32
    %c0_i32_69 = arith.constant 0 : i32
    %40 = tpu.memref_slice %arg5[%c0_i32_66, %c0_i32_67, %c0_i32_68, %c0_i32_69] : memref<1x8x16x16xf32, #tpu.memory_space<vmem>> -> memref<1x8x16x16xf32, #tpu.memory_space<vmem>>
    %41 = tpu.memref_squeeze %40 : memref<1x8x16x16xf32, #tpu.memory_space<vmem>> -> memref<8x16x16xf32, #tpu.memory_space<vmem>>
    %c0_70 = arith.constant 0 : index
    %c2_71 = arith.constant 2 : index
    %c2_72 = arith.constant 2 : index
    %42 = vector.load %41[%c0_70, %c2_71, %c2_72] : memref<8x16x16xf32, #tpu.memory_space<vmem>>, vector<8x14x14xf32>
    %43 = arith.minimumf %21, %24 : vector<8x14x14xf32>
    %44 = arith.maximumf %21, %24 : vector<8x14x14xf32>
    %45 = arith.minimumf %30, %33 : vector<8x14x14xf32>
    %46 = arith.maximumf %30, %33 : vector<8x14x14xf32>
    %47 = arith.minimumf %39, %42 : vector<8x14x14xf32>
    %48 = arith.maximumf %39, %42 : vector<8x14x14xf32>
    %49 = arith.minimumf %18, %43 : vector<8x14x14xf32>
    %50 = arith.maximumf %18, %43 : vector<8x14x14xf32>
    %51 = arith.minimumf %27, %45 : vector<8x14x14xf32>
    %52 = arith.maximumf %27, %45 : vector<8x14x14xf32>
    %53 = arith.minimumf %36, %47 : vector<8x14x14xf32>
    %54 = arith.maximumf %36, %47 : vector<8x14x14xf32>
    %55 = arith.minimumf %50, %44 : vector<8x14x14xf32>
    %56 = arith.maximumf %50, %44 : vector<8x14x14xf32>
    %57 = arith.minimumf %52, %46 : vector<8x14x14xf32>
    %58 = arith.maximumf %52, %46 : vector<8x14x14xf32>
    %59 = arith.minimumf %54, %48 : vector<8x14x14xf32>
    %60 = arith.maximumf %54, %48 : vector<8x14x14xf32>
    %61 = arith.maximumf %49, %51 : vector<8x14x14xf32>
    %62 = arith.minimumf %58, %60 : vector<8x14x14xf32>
    %63 = arith.minimumf %57, %59 : vector<8x14x14xf32>
    %64 = arith.maximumf %57, %59 : vector<8x14x14xf32>
    %65 = arith.maximumf %61, %53 : vector<8x14x14xf32>
    %66 = arith.maximumf %55, %63 : vector<8x14x14xf32>
    %67 = arith.minimumf %56, %62 : vector<8x14x14xf32>
    %68 = arith.minimumf %66, %64 : vector<8x14x14xf32>
    %69 = arith.minimumf %68, %67 : vector<8x14x14xf32>
    %70 = arith.maximumf %68, %67 : vector<8x14x14xf32>
    %71 = arith.maximumf %65, %69 : vector<8x14x14xf32>
    %72 = arith.minimumf %71, %70 : vector<8x14x14xf32>
    %c0_73 = arith.constant 0 : index
    %c0_74 = arith.constant 0 : index
    %c0_75 = arith.constant 0 : index
    %73 = vector.load %arg4[%c0_73, %c0_74, %c0_75] : memref<8x14x14xf32, #tpu.memory_space<vmem>>, vector<8x14x14xf32>
    tpu.vector_store %arg4[%c0_73, %c0_74, %c0_75], %72 {strides = array<i32>} : memref<8x14x14xf32, #tpu.memory_space<vmem>>, vector<8x14x14xf32>,
    return
  }
  func.func @transform_1(%arg0: i32, %arg1: i32, %arg2: i32) -> (i32, i32, i32) {
    %c1_i32 = arith.constant 1 : i32
    %0 = arith.muli %arg1, %c1_i32 : i32
    %1 = arith.addi %0, %arg2 : i32
    %c0_i32 = arith.constant 0 : i32
    %c0_i32_0 = arith.constant 0 : i32
    return %arg0, %1, %c0_i32 : i32, i32, i32
  }
}

</mosaic_0001>

<llo_original>
// kernel: median_pool2d.1
$region0: #{median_pool2d.1}
  #allocation0 [shape = 'u32[]', space=smem, size = 0x4, offset = 0x4, fixed_abs, tag = 'smem constant byte address 0x4 - core index']
  #allocation1 [shape = 'u32[144,128]{1,0:T(1,128)}', space=vmem, size = 0x12000, scoped, tag = 'internal scratch']
  #allocation2 [shape = 'f32[1,8,16,16]{3,2,1,0:T(8,128)}', space=vmem, size = 0x10000, scoped, tag = 'scratch operand']
  #allocation3 [shape = 's32[1]{0}', space=sflag, size = 0x4, scoped, tag = 'scratch operand']
  #allocation4 [shape = 's32[]', space=sflag, size = 0x4, offset = 0, fixed_abs, tag = 'sflag constant byte address 0x0 - dummy sync flag']
  #allocation5 [shape = 's32[]', space=sflag, size = 0x4, offset = 0, fixed_abs, tag = 'sflag constant byte address 0x0 - dummy sync flag']
  #allocation6 [shape = 'u32[]', space=smem, size = 0x4, offset = 0x44, fixed_abs, tag = 'smem constant byte address 0x44 - assertion arg 0']
  #allocation7 [shape = 'u32[]', space=smem, size = 0x4, offset = 0x48, fixed_abs, tag = 'smem constant byte address 0x48 - assertion arg 1']
  %s0 = inlined_call_operand.hbm [shape: f32[8,16,16], index: 0, kind: input, shape index: {}]
  %s1 = inlined_call_operand.vmem [shape: f32[8,14,14], index: 1, kind: output, shape index: {}]
  %s2 = sld [smem:[#allocation0]]
  $region14: #{median_pool2d.1} parent=0
    _
  %s4 = ssub.s32 1, %s2
  %s5 = scalar_select 0, %s4, %s2
  %s6 = sadd.s32 0, 0
  %s7 = smul.u32 2, %s6
  %p8 = scmp.lt.s32.totalorder %s7, 1
  %s9 = scalar_select %p8, %s7, 1
  %s10 = smul.addr %s9, 8
  %s11 = scalar_lea.vmem %s1, %s10
  %s12 = sadd.s32 0, 0
  %s13 = smul.u32 2, %s12
  %p14 = scmp.lt.s32.totalorder %s13, 1
  %s15 = scalar_select %p14, %s13, 1
  %s16 = smul.addr %s15, 8
  %s17 = scalar_lea.vmem %s1, %s16
  %s18 = sadd.s32 0, 0
  %s19 = smul.u32 2, %s18
  %s20 = sadd.s32 0, 0
  %s21 = smul.u32 0, 8
  %s22 = smul.u32 %s20, 14
  %s23 = smul.u32 %s21, 16
  %s24 = sadd.s32 %s22, %s23
  %s25 = smul.addr %s24, 16
  %s26 = scalar_lea.hbm %s0, %s25
  // Predicated region
  $region2: #{median_pool2d.1} parent=0 // pred_check
    _
  $region3: #{median_pool2d.1} parent=0 // pred_check_branch
    %28 = sbr.rel target = $region5
  $region4: #{median_pool2d.1} parent=0 // pred_region
    %29 = sst [smem:[#allocation6]] [#allocation5]
    %30 = sst [smem:[#allocation7]] [#allocation4]
  $region5: #{median_pool2d.1} parent=0 // pred_fallthru
    _
  %32 = shalt.err (0)
  %s34 = sshll.u32 [#allocation2], 4
  %s35 = int_to_ptr.vmem [resolvable:$true] %s34
  %37 = dma.hbm_to_vmem [thread:$0]  %s26, 2048, %s35, [#allocation3]
  %s38 = smul.u32 8, 16
  %s39 = smul.u32 %s38, 1
  %s40 = sshll.u32 %s39, 4
  %41 = dma.done [#allocation3], %s40
  %v42 = vld [vmem:[#allocation2] sm:$0xff]
  %v43 = vld [vmem:[#allocation2 + $0x8] sm:$0x3f]
  %v44 = vld [vmem:[#allocation2 + $0x10] sm:$0xff]
  %v45 = vld [vmem:[#allocation2 + $0x18] sm:$0x3f]
  %v46 = vld [vmem:[#allocation2 + $0x20] sm:$0xff]
  %v47 = vld [vmem:[#allocation2 + $0x28] sm:$0x3f]
  %v48 = vld [vmem:[#allocation2 + $0x30] sm:$0xff]
  %v49 = vld [vmem:[#allocation2 + $0x38] sm:$0x3f]
  %v50 = vld [vmem:[#allocation2 + $0x40] sm:$0xff]
  %v51 = vld [vmem:[#allocation2 + $0x48] sm:$0x3f]
  %v52 = vld [vmem:[#allocation2 + $0x50] sm:$0xff]
  %v53 = vld [vmem:[#allocation2 + $0x58] sm:$0x3f]
  %v54 = vld [vmem:[#allocation2 + $0x60] sm:$0xff]
  %v55 = vld [vmem:[#allocation2 + $0x68] sm:$0x3f]
  %v56 = vld [vmem:[#allocation2 + $0x70] sm:$0xff]
  %v57 = vld [vmem:[#allocation2 + $0x78] sm:$0x3f]
  %v58 = vld [vmem:[#allocation2 + $0x1] sm:$0xff]
  %v59 = vld [vmem:[#allocation2 + $0x9] sm:$0x3f]
  %v60 = vld [vmem:[#allocation2 + $0x11] sm:$0xff]
  %v61 = vld [vmem:[#allocation2 + $0x19] sm:$0x3f]
  %v62 = vld [vmem:[#allocation2 + $0x21] sm:$0xff]
  %v63 = vld [vmem:[#allocation2 + $0x29] sm:$0x3f]
  %v64 = vld [vmem:[#allocation2 + $0x31] sm:$0xff]
  %v65 = vld [vmem:[#allocation2 + $0x39] sm:$0x3f]
  %v66 = vld [vmem:[#allocation2 + $0x41] sm:$0xff]
  %v67 = vld [vmem:[#allocation2 + $0x49] sm:$0x3f]
  %v68 = vld [vmem:[#allocation2 + $0x51] sm:$0xff]
  %v69 = vld [vmem:[#allocation2 + $0x59] sm:$0x3f]
  %v70 = vld [vmem:[#allocation2 + $0x61] sm:$0xff]
  %v71 = vld [vmem:[#allocation2 + $0x69] sm:$0x3f]
  %v72 = vld [vmem:[#allocation2 + $0x71] sm:$0xff]
  %v73 = vld [vmem:[#allocation2 + $0x79] sm:$0x3f]
  %v74 = vld [vmem:[#allocation2 + $0x2] sm:$0xff]
  %v75 = vld [vmem:[#allocation2 + $0xa] sm:$0x3f]
  %v76 = vld [vmem:[#allocation2 + $0x12] sm:$0xff]
  %v77 = vld [vmem:[#allocation2 + $0x1a] sm:$0x3f]
  %v78 = vld [vmem:[#allocation2 + $0x22] sm:$0xff]
  %v79 = vld [vmem:[#allocation2 + $0x2a] sm:$0x3f]
  %v80 = vld [vmem:[#allocation2 + $0x32] sm:$0xff]
  %v81 = vld [vmem:[#allocation2 + $0x3a] sm:$0x3f]
  %v82 = vld [vmem:[#allocation2 + $0x42] sm:$0xff]
  %v83 = vld [vmem:[#allocation2 + $0x4a] sm:$0x3f]
  %v84 = vld [vmem:[#allocation2 + $0x52] sm:$0xff]
  %v85 = vld [vmem:[#allocation2 + $0x5a] sm:$0x3f]
  %v86 = vld [vmem:[#allocation2 + $0x62] sm:$0xff]
  %v87 = vld [vmem:[#allocation2 + $0x6a] sm:$0x3f]
  %v88 = vld [vmem:[#allocation2 + $0x72] sm:$0xff]
  %v89 = vld [vmem:[#allocation2 + $0x7a] sm:$0x3f]
  %106 = vrot.lane.b32.xlu0 %v42, 127
  %v107 = vpop.permute.xlu0 %106
  %108 = vrot.lane.b32.xlu0 %v43, 127
  %v109 = vpop.permute.xlu0 %108
  %110 = vrot.lane.b32.xlu0 %v44, 127
  %v111 = vpop.permute.xlu0 %110
  %112 = vrot.lane.b32.xlu0 %v45, 127
  %v113 = vpop.permute.xlu0 %112
  %114 = vrot.lane.b32.xlu0 %v46, 127
  %v115 = vpop.permute.xlu0 %114
  %116 = vrot.lane.b32.xlu0 %v47, 127
  %v117 = vpop.permute.xlu0 %116
  %118 = vrot.lane.b32.xlu0 %v48, 127
  %v119 = vpop.permute.xlu0 %118
  %120 = vrot.lane.b32.xlu0 %v49, 127
  %v121 = vpop.permute.xlu0 %120
  %122 = vrot.lane.b32.xlu0 %v50, 127
  %v123 = vpop.permute.xlu0 %122
  %124 = vrot.lane.b32.xlu0 %v51, 127
  %v125 = vpop.permute.xlu0 %124
  %126 = vrot.lane.b32.xlu0 %v52, 127
  %v127 = vpop.permute.xlu0 %126
  %128 = vrot.lane.b32.xlu0 %v53, 127
  %v129 = vpop.permute.xlu0 %128
  %130 = vrot.lane.b32.xlu0 %v54, 127
  %v131 = vpop.permute.xlu0 %130
  %132 = vrot.lane.b32.xlu0 %v55, 127
  %v133 = vpop.permute.xlu0 %132
  %134 = vrot.lane.b32.xlu0 %v56, 127
  %v135 = vpop.permute.xlu0 %134
  %136 = vrot.lane.b32.xlu0 %v57, 127
  %v137 = vpop.permute.xlu0 %136
  %v154 = vmin.f32 %v42, %v107
  %v155 = vmin.f32 %v43, %v109
  %v156 = vmin.f32 %v44, %v111
  %v157 = vmin.f32 %v45, %v113
  %v158 = vmin.f32 %v46, %v115
  %v159 = vmin.f32 %v47, %v117
  %v160 = vmin.f32 %v48, %v119
  %v161 = vmin.f32 %v49, %v121
  %v162 = vmin.f32 %v50, %v123
  %v163 = vmin.f32 %v51, %v125
  %v164 = vmin.f32 %v52, %v127
  %v165 = vmin.f32 %v53, %v129
  %v166 = vmin.f32 %v54, %v131
  %v167 = vmin.f32 %v55, %v133
  %v168 = vmin.f32 %v56, %v135
  %v169 = vmin.f32 %v57, %v137
  %v170 = vmax.f32 %v42, %v107
  %v171 = vmax.f32 %v43, %v109
  %v172 = vmax.f32 %v44, %v111
  %v173 = vmax.f32 %v45, %v113
  %v174 = vmax.f32 %v46, %v115
  %v175 = vmax.f32 %v47, %v117
  %v176 = vmax.f32 %v48, %v119
  %v177 = vmax.f32 %v49, %v121
  %v178 = vmax.f32 %v50, %v123
  %v179 = vmax.f32 %v51, %v125
  %v180 = vmax.f32 %v52, %v127
  %v181 = vmax.f32 %v53, %v129
  %v182 = vmax.f32 %v54, %v131
  %v183 = vmax.f32 %v55, %v133
  %v184 = vmax.f32 %v56, %v135
  %v185 = vmax.f32 %v57, %v137
  %202 = vrot.lane.b32.xlu0 %v58, 127
  %v203 = vpop.permute.xlu0 %202
  %204 = vrot.lane.b32.xlu0 %v59, 127
  %v205 = vpop.permute.xlu0 %204
  %206 = vrot.lane.b32.xlu0 %v60, 127
  %v207 = vpop.permute.xlu0 %206
  %208 = vrot.lane.b32.xlu0 %v61, 127
  %v209 = vpop.permute.xlu0 %208
  %210 = vrot.lane.b32.xlu0 %v62, 127
  %v211 = vpop.permute.xlu0 %210
  %212 = vrot.lane.b32.xlu0 %v63, 127
  %v213 = vpop.permute.xlu0 %212
  %214 = vrot.lane.b32.xlu0 %v64, 127
  %v215 = vpop.permute.xlu0 %214
  %216 = vrot.lane.b32.xlu0 %v65, 127
  %v217 = vpop.permute.xlu0 %216
  %218 = vrot.lane.b32.xlu0 %v66, 127
  %v219 = vpop.permute.xlu0 %218
  %220 = vrot.lane.b32.xlu0 %v67, 127
  %v221 = vpop.permute.xlu0 %220
  %222 = vrot.lane.b32.xlu0 %v68, 127
  %v223 = vpop.permute.xlu0 %222
  %224 = vrot.lane.b32.xlu0 %v69, 127
  %v225 = vpop.permute.xlu0 %224
  %226 = vrot.lane.b32.xlu0 %v70, 127
  %v227 = vpop.permute.xlu0 %226
  %228 = vrot.lane.b32.xlu0 %v71, 127
  %v229 = vpop.permute.xlu0 %228
  %230 = vrot.lane.b32.xlu0 %v72, 127
  %v231 = vpop.permute.xlu0 %230
  %232 = vrot.lane.b32.xlu0 %v73, 127
  %v233 = vpop.permute.xlu0 %232
  %v250 = vmin.f32 %v58, %v203
  %v251 = vmin.f32 %v59, %v205
  %v252 = vmin.f32 %v60, %v207
  %v253 = vmin.f32 %v61, %v209
  %v254 = vmin.f32 %v62, %v211
  %v255 = vmin.f32 %v63, %v213
  %v256 = vmin.f32 %v64, %v215
  %v257 = vmin.f32 %v65, %v217
  %v258 = vmin.f32 %v66, %v219
  %v259 = vmin.f32 %v67, %v221
  %v260 = vmin.f32 %v68, %v223
  %v261 = vmin.f32 %v69, %v225
  %v262 = vmin.f32 %v70, %v227
  %v263 = vmin.f32 %v71, %v229
  %v264 = vmin.f32 %v72, %v231
  %v265 = vmin.f32 %v73, %v233
  %v266 = vmax.f32 %v58, %v203
  %v267 = vmax.f32 %v59, %v205
  %v268 = vmax.f32 %v60, %v207
  %v269 = vmax.f32 %v61, %v209
  %v270 = vmax.f32 %v62, %v211
  %v271 = vmax.f32 %v63, %v213
  %v272 = vmax.f32 %v64, %v215
  %v273 = vmax.f32 %v65, %v217
  %v274 = vmax.f32 %v66, %v219
  %v275 = vmax.f32 %v67, %v221
  %v276 = vmax.f32 %v68, %v223
  %v277 = vmax.f32 %v69, %v225
  %v278 = vmax.f32 %v70, %v227
  %v279 = vmax.f32 %v71, %v229
  %v280 = vmax.f32 %v72, %v231
  %v281 = vmax.f32 %v73, %v233
  %298 = vrot.lane.b32.xlu0 %v74, 127
  %v299 = vpop.permute.xlu0 %298
  %300 = vrot.lane.b32.xlu0 %v75, 127
  %v301 = vpop.permute.xlu0 %300
  %302 = vrot.lane.b32.xlu0 %v76, 127
  %v303 = vpop.permute.xlu0 %302
  %304 = vrot.lane.b32.xlu0 %v77, 127
  %v305 = vpop.permute.xlu0 %304
  %306 = vrot.lane.b32.xlu0 %v78, 127
  %v307 = vpop.permute.xlu0 %306
  %308 = vrot.lane.b32.xlu0 %v79, 127
  %v309 = vpop.permute.xlu0 %308
  %310 = vrot.lane.b32.xlu0 %v80, 127
  %v311 = vpop.permute.xlu0 %310
  %312 = vrot.lane.b32.xlu0 %v81, 127
  %v313 = vpop.permute.xlu0 %312
  %314 = vrot.lane.b32.xlu0 %v82, 127
  %v315 = vpop.permute.xlu0 %314
  %316 = vrot.lane.b32.xlu0 %v83, 127
  %v317 = vpop.permute.xlu0 %316
  %318 = vrot.lane.b32.xlu0 %v84, 127
  %v319 = vpop.permute.xlu0 %318
  %320 = vrot.lane.b32.xlu0 %v85, 127
  %v321 = vpop.permute.xlu0 %320
  %322 = vrot.lane.b32.xlu0 %v86, 127
  %v323 = vpop.permute.xlu0 %322
  %324 = vrot.lane.b32.xlu0 %v87, 127
  %v325 = vpop.permute.xlu0 %324
  %326 = vrot.lane.b32.xlu0 %v88, 127
  %v327 = vpop.permute.xlu0 %326
  %328 = vrot.lane.b32.xlu0 %v89, 127
  %v329 = vpop.permute.xlu0 %328
  %v346 = vmin.f32 %v74, %v299
  %v347 = vmin.f32 %v75, %v301
  %v348 = vmin.f32 %v76, %v303
  %v349 = vmin.f32 %v77, %v305
  %v350 = vmin.f32 %v78, %v307
  %v351 = vmin.f32 %v79, %v309
  %v352 = vmin.f32 %v80, %v311
  %v353 = vmin.f32 %v81, %v313
  %v354 = vmin.f32 %v82, %v315
  %v355 = vmin.f32 %v83, %v317
  %v356 = vmin.f32 %v84, %v319
  %v357 = vmin.f32 %v85, %v321
  %v358 = vmin.f32 %v86, %v323
  %v359 = vmin.f32 %v87, %v325
  %v360 = vmin.f32 %v88, %v327
  %v361 = vmin.f32 %v89, %v329
  %v362 = vmax.f32 %v74, %v299
  %v363 = vmax.f32 %v75, %v301
  %v364 = vmax.f32 %v76, %v303
  %v365 = vmax.f32 %v77, %v305
  %v366 = vmax.f32 %v78, %v307
  %v367 = vmax.f32 %v79, %v309
  %v368 = vmax.f32 %v80, %v311
  %v369 = vmax.f32 %v81, %v313
  %v370 = vmax.f32 %v82, %v315
  %v371 = vmax.f32 %v83, %v317
  %v372 = vmax.f32 %v84, %v319
  %v373 = vmax.f32 %v85, %v321
  %v374 = vmax.f32 %v86, %v323
  %v375 = vmax.f32 %v87, %v325
  %v376 = vmax.f32 %v88, %v327
  %v377 = vmax.f32 %v89, %v329
  %394 = vrot.lane.b32.xlu0 %v154, 127
  %v395 = vpop.permute.xlu0 %394
  %396 = vrot.lane.b32.xlu0 %v155, 127
  %v397 = vpop.permute.xlu0 %396
  %398 = vrot.lane.b32.xlu0 %v156, 127
  %v399 = vpop.permute.xlu0 %398
  %400 = vrot.lane.b32.xlu0 %v157, 127
  %v401 = vpop.permute.xlu0 %400
  %402 = vrot.lane.b32.xlu0 %v158, 127
  %v403 = vpop.permute.xlu0 %402
  %404 = vrot.lane.b32.xlu0 %v159, 127
  %v405 = vpop.permute.xlu0 %404
  %406 = vrot.lane.b32.xlu0 %v160, 127
  %v407 = vpop.permute.xlu0 %406
  %408 = vrot.lane.b32.xlu0 %v161, 127
  %v409 = vpop.permute.xlu0 %408
  %410 = vrot.lane.b32.xlu0 %v162, 127
  %v411 = vpop.permute.xlu0 %410
  %412 = vrot.lane.b32.xlu0 %v163, 127
  %v413 = vpop.permute.xlu0 %412
  %414 = vrot.lane.b32.xlu0 %v164, 127
  %v415 = vpop.permute.xlu0 %414
  %416 = vrot.lane.b32.xlu0 %v165, 127
  %v417 = vpop.permute.xlu0 %416
  %418 = vrot.lane.b32.xlu0 %v166, 127
  %v419 = vpop.permute.xlu0 %418
  %420 = vrot.lane.b32.xlu0 %v167, 127
  %v421 = vpop.permute.xlu0 %420
  %422 = vrot.lane.b32.xlu0 %v168, 127
  %v423 = vpop.permute.xlu0 %422
  %424 = vrot.lane.b32.xlu0 %v169, 127
  %v425 = vpop.permute.xlu0 %424
  %v442 = vmin.f32 %v42, %v395
  %v443 = vmin.f32 %v43, %v397
  %v444 = vmin.f32 %v44, %v399
  %v445 = vmin.f32 %v45, %v401
  %v446 = vmin.f32 %v46, %v403
  %v447 = vmin.f32 %v47, %v405
  %v448 = vmin.f32 %v48, %v407
  %v449 = vmin.f32 %v49, %v409
  %v450 = vmin.f32 %v50, %v411
  %v451 = vmin.f32 %v51, %v413
  %v452 = vmin.f32 %v52, %v415
  %v453 = vmin.f32 %v53, %v417
  %v454 = vmin.f32 %v54, %v419
  %v455 = vmin.f32 %v55, %v421
  %v456 = vmin.f32 %v56, %v423
  %v457 = vmin.f32 %v57, %v425
  %v458 = vmax.f32 %v42, %v395
  %v459 = vmax.f32 %v43, %v397
  %v460 = vmax.f32 %v44, %v399
  %v461 = vmax.f32 %v45, %v401
  %v462 = vmax.f32 %v46, %v403
  %v463 = vmax.f32 %v47, %v405
  %v464 = vmax.f32 %v48, %v407
  %v465 = vmax.f32 %v49, %v409
  %v466 = vmax.f32 %v50, %v411
  %v467 = vmax.f32 %v51, %v413
  %v468 = vmax.f32 %v52, %v415
  %v469 = vmax.f32 %v53, %v417
  %v470 = vmax.f32 %v54, %v419
  %v471 = vmax.f32 %v55, %v421
  %v472 = vmax.f32 %v56, %v423
  %v473 = vmax.f32 %v57, %v425
  %490 = vrot.lane.b32.xlu0 %v250, 127
  %v491 = vpop.permute.xlu0 %490
  %492 = vrot.lane.b32.xlu0 %v251, 127
  %v493 = vpop.permute.xlu0 %492
  %494 = vrot.lane.b32.xlu0 %v252, 127
  %v495 = vpop.permute.xlu0 %494
  %496 = vrot.lane.b32.xlu0 %v253, 127
  %v497 = vpop.permute.xlu0 %496
  %498 = vrot.lane.b32.xlu0 %v254, 127
  %v499 = vpop.permute.xlu0 %498
  %500 = vrot.lane.b32.xlu0 %v255, 127
  %v501 = vpop.permute.xlu0 %500
  %502 = vrot.lane.b32.xlu0 %v256, 127
  %v503 = vpop.permute.xlu0 %502
  %504 = vrot.lane.b32.xlu0 %v257, 127
  %v505 = vpop.permute.xlu0 %504
  %506 = vrot.lane.b32.xlu0 %v258, 127
  %v507 = vpop.permute.xlu0 %506
  %508 = vrot.lane.b32.xlu0 %v259, 127
  %v509 = vpop.permute.xlu0 %508
  %510 = vrot.lane.b32.xlu0 %v260, 127
  %v511 = vpop.permute.xlu0 %510
  %512 = vrot.lane.b32.xlu0 %v261, 127
  %v513 = vpop.permute.xlu0 %512
  %514 = vrot.lane.b32.xlu0 %v262, 127
  %v515 = vpop.permute.xlu0 %514
  %516 = vrot.lane.b32.xlu0 %v263, 127
  %v517 = vpop.permute.xlu0 %516
  %518 = vrot.lane.b32.xlu0 %v264, 127
  %v519 = vpop.permute.xlu0 %518
  %520 = vrot.lane.b32.xlu0 %v265, 127
  %v521 = vpop.permute.xlu0 %520
  %v538 = vmin.f32 %v58, %v491
  %v539 = vmin.f32 %v59, %v493
  %v540 = vmin.f32 %v60, %v495
  %v541 = vmin.f32 %v61, %v497
  %v542 = vmin.f32 %v62, %v499
  %v543 = vmin.f32 %v63, %v501
  %v544 = vmin.f32 %v64, %v503
  %v545 = vmin.f32 %v65, %v505
  %v546 = vmin.f32 %v66, %v507
  %v547 = vmin.f32 %v67, %v509
  %v548 = vmin.f32 %v68, %v511
  %v549 = vmin.f32 %v69, %v513
  %v550 = vmin.f32 %v70, %v515
  %v551 = vmin.f32 %v71, %v517
  %v552 = vmin.f32 %v72, %v519
  %v553 = vmin.f32 %v73, %v521
  %v554 = vmax.f32 %v58, %v491
  %v555 = vmax.f32 %v59, %v493
  %v556 = vmax.f32 %v60, %v495
  %v557 = vmax.f32 %v61, %v497
  %v558 = vmax.f32 %v62, %v499
  %v559 = vmax.f32 %v63, %v501
  %v560 = vmax.f32 %v64, %v503
  %v561 = vmax.f32 %v65, %v505
  %v562 = vmax.f32 %v66, %v507
  %v563 = vmax.f32 %v67, %v509
  %v564 = vmax.f32 %v68, %v511
  %v565 = vmax.f32 %v69, %v513
  %v566 = vmax.f32 %v70, %v515
  %v567 = vmax.f32 %v71, %v517
  %v568 = vmax.f32 %v72, %v519
  %v569 = vmax.f32 %v73, %v521
  %586 = vrot.lane.b32.xlu0 %v346, 127
  %v587 = vpop.permute.xlu0 %586
  %588 = vrot.lane.b32.xlu0 %v347, 127
  %v589 = vpop.permute.xlu0 %588
  %590 = vrot.lane.b32.xlu0 %v348, 127
  %v591 = vpop.permute.xlu0 %590
  %592 = vrot.lane.b32.xlu0 %v349, 127
  %v593 = vpop.permute.xlu0 %592
  %594 = vrot.lane.b32.xlu0 %v350, 127
  %v595 = vpop.permute.xlu0 %594
  %596 = vrot.lane.b32.xlu0 %v351, 127
  %v597 = vpop.permute.xlu0 %596
  %598 = vrot.lane.b32.xlu0 %v352, 127
  %v599 = vpop.permute.xlu0 %598
  %600 = vrot.lane.b32.xlu0 %v353, 127
  %v601 = vpop.permute.xlu0 %600
  %602 = vrot.lane.b32.xlu0 %v354, 127
  %v603 = vpop.permute.xlu0 %602
  %604 = vrot.lane.b32.xlu0 %v355, 127
  %v605 = vpop.permute.xlu0 %604
  %606 = vrot.lane.b32.xlu0 %v356, 127
  %v607 = vpop.permute.xlu0 %606
  %608 = vrot.lane.b32.xlu0 %v357, 127
  %v609 = vpop.permute.xlu0 %608
  %610 = vrot.lane.b32.xlu0 %v358, 127
  %v611 = vpop.permute.xlu0 %610
  %612 = vrot.lane.b32.xlu0 %v359, 127
  %v613 = vpop.permute.xlu0 %612
  %614 = vrot.lane.b32.xlu0 %v360, 127
  %v615 = vpop.permute.xlu0 %614
  %616 = vrot.lane.b32.xlu0 %v361, 127
  %v617 = vpop.permute.xlu0 %616
  %v634 = vmin.f32 %v74, %v587
  %v635 = vmin.f32 %v75, %v589
  %v636 = vmin.f32 %v76, %v591
  %v637 = vmin.f32 %v77, %v593
  %v638 = vmin.f32 %v78, %v595
  %v639 = vmin.f32 %v79, %v597
  %v640 = vmin.f32 %v80, %v599
  %v641 = vmin.f32 %v81, %v601
  %v642 = vmin.f32 %v82, %v603
  %v643 = vmin.f32 %v83, %v605
  %v644 = vmin.f32 %v84, %v607
  %v645 = vmin.f32 %v85, %v609
  %v646 = vmin.f32 %v86, %v611
  %v647 = vmin.f32 %v87, %v613
  %v648 = vmin.f32 %v88, %v615
  %v649 = vmin.f32 %v89, %v617
  %v650 = vmax.f32 %v74, %v587
  %v651 = vmax.f32 %v75, %v589
  %v652 = vmax.f32 %v76, %v591
  %v653 = vmax.f32 %v77, %v593
  %v654 = vmax.f32 %v78, %v595
  %v655 = vmax.f32 %v79, %v597
  %v656 = vmax.f32 %v80, %v599
  %v657 = vmax.f32 %v81, %v601
  %v658 = vmax.f32 %v82, %v603
  %v659 = vmax.f32 %v83, %v605
  %v660 = vmax.f32 %v84, %v607
  %v661 = vmax.f32 %v85, %v609
  %v662 = vmax.f32 %v86, %v611
  %v663 = vmax.f32 %v87, %v613
  %v664 = vmax.f32 %v88, %v615
  %v665 = vmax.f32 %v89, %v617
  %682 = vrot.lane.b32.xlu0 %v170, 127
  %v683 = vpop.permute.xlu0 %682
  %684 = vrot.lane.b32.xlu0 %v171, 127
  %v685 = vpop.permute.xlu0 %684
  %686 = vrot.lane.b32.xlu0 %v172, 127
  %v687 = vpop.permute.xlu0 %686
  %688 = vrot.lane.b32.xlu0 %v173, 127
  %v689 = vpop.permute.xlu0 %688
  %690 = vrot.lane.b32.xlu0 %v174, 127
  %v691 = vpop.permute.xlu0 %690
  %692 = vrot.lane.b32.xlu0 %v175, 127
  %v693 = vpop.permute.xlu0 %692
  %694 = vrot.lane.b32.xlu0 %v176, 127
  %v695 = vpop.permute.xlu0 %694
  %696 = vrot.lane.b32.xlu0 %v177, 127
  %v697 = vpop.permute.xlu0 %696
  %698 = vrot.lane.b32.xlu0 %v178, 127
  %v699 = vpop.permute.xlu0 %698
  %700 = vrot.lane.b32.xlu0 %v179, 127
  %v701 = vpop.permute.xlu0 %700
  %702 = vrot.lane.b32.xlu0 %v180, 127
  %v703 = vpop.permute.xlu0 %702
  %704 = vrot.lane.b32.xlu0 %v181, 127
  %v705 = vpop.permute.xlu0 %704
  %706 = vrot.lane.b32.xlu0 %v182, 127
  %v707 = vpop.permute.xlu0 %706
  %708 = vrot.lane.b32.xlu0 %v183, 127
  %v709 = vpop.permute.xlu0 %708
  %710 = vrot.lane.b32.xlu0 %v184, 127
  %v711 = vpop.permute.xlu0 %710
  %712 = vrot.lane.b32.xlu0 %v185, 127
  %v713 = vpop.permute.xlu0 %712
  %v730 = vmin.f32 %v458, %v683
  %v731 = vmin.f32 %v459, %v685
  %v732 = vmin.f32 %v460, %v687
  %v733 = vmin.f32 %v461, %v689
  %v734 = vmin.f32 %v462, %v691
  %v735 = vmin.f32 %v463, %v693
  %v736 = vmin.f32 %v464, %v695
  %v737 = vmin.f32 %v465, %v697
  %v738 = vmin.f32 %v466, %v699
  %v739 = vmin.f32 %v467, %v701
  %v740 = vmin.f32 %v468, %v703
  %v741 = vmin.f32 %v469, %v705
  %v742 = vmin.f32 %v470, %v707
  %v743 = vmin.f32 %v471, %v709
  %v744 = vmin.f32 %v472, %v711
  %v745 = vmin.f32 %v473, %v713
  %v746 = vmax.f32 %v458, %v683
  %v747 = vmax.f32 %v459, %v685
  %v748 = vmax.f32 %v460, %v687
  %v749 = vmax.f32 %v461, %v689
  %v750 = vmax.f32 %v462, %v691
  %v751 = vmax.f32 %v463, %v693
  %v752 = vmax.f32 %v464, %v695
  %v753 = vmax.f32 %v465, %v697
  %v754 = vmax.f32 %v466, %v699
  %v755 = vmax.f32 %v467, %v701
  %v756 = vmax.f32 %v468, %v703
  %v757 = vmax.f32 %v469, %v705
  %v758 = vmax.f32 %v470, %v707
  %v759 = vmax.f32 %v471, %v709
  %v760 = vmax.f32 %v472, %v711
  %v761 = vmax.f32 %v473, %v713
  %778 = vrot.lane.b32.xlu0 %v266, 127
  %v779 = vpop.permute.xlu0 %778
  %780 = vrot.lane.b32.xlu0 %v267, 127
  %v781 = vpop.permute.xlu0 %780
  %782 = vrot.lane.b32.xlu0 %v268, 127
  %v783 = vpop.permute.xlu0 %782
  %784 = vrot.lane.b32.xlu0 %v269, 127
  %v785 = vpop.permute.xlu0 %784
  %786 = vrot.lane.b32.xlu0 %v270, 127
  %v787 = vpop.permute.xlu0 %786
  %788 = vrot.lane.b32.xlu0 %v271, 127
  %v789 = vpop.permute.xlu0 %788
  %790 = vrot.lane.b32.xlu0 %v272, 127
  %v791 = vpop.permute.xlu0 %790
  %792 = vrot.lane.b32.xlu0 %v273, 127
  %v793 = vpop.permute.xlu0 %792
  %794 = vrot.lane.b32.xlu0 %v274, 127
  %v795 = vpop.permute.xlu0 %794
  %796 = vrot.lane.b32.xlu0 %v275, 127
  %v797 = vpop.permute.xlu0 %796
  %798 = vrot.lane.b32.xlu0 %v276, 127
  %v799 = vpop.permute.xlu0 %798
  %800 = vrot.lane.b32.xlu0 %v277, 127
  %v801 = vpop.permute.xlu0 %800
  %802 = vrot.lane.b32.xlu0 %v278, 127
  %v803 = vpop.permute.xlu0 %802
  %804 = vrot.lane.b32.xlu0 %v279, 127
  %v805 = vpop.permute.xlu0 %804
  %806 = vrot.lane.b32.xlu0 %v280, 127
  %v807 = vpop.permute.xlu0 %806
  %808 = vrot.lane.b32.xlu0 %v281, 127
  %v809 = vpop.permute.xlu0 %808
  %v826 = vmin.f32 %v554, %v779
  %v827 = vmin.f32 %v555, %v781
  %v828 = vmin.f32 %v556, %v783
  %v829 = vmin.f32 %v557, %v785
  %v830 = vmin.f32 %v558, %v787
  %v831 = vmin.f32 %v559, %v789
  %v832 = vmin.f32 %v560, %v791
  %v833 = vmin.f32 %v561, %v793
  %v834 = vmin.f32 %v562, %v795
  %v835 = vmin.f32 %v563, %v797
  %v836 = vmin.f32 %v564, %v799
  %v837 = vmin.f32 %v565, %v801
  %v838 = vmin.f32 %v566, %v803
  %v839 = vmin.f32 %v567, %v805
  %v840 = vmin.f32 %v568, %v807
  %v841 = vmin.f32 %v569, %v809
  %v842 = vmax.f32 %v554, %v779
  %v843 = vmax.f32 %v555, %v781
  %v844 = vmax.f32 %v556, %v783
  %v845 = vmax.f32 %v557, %v785
  %v846 = vmax.f32 %v558, %v787
  %v847 = vmax.f32 %v559, %v789
  %v848 = vmax.f32 %v560, %v791
  %v849 = vmax.f32 %v561, %v793
  %v850 = vmax.f32 %v562, %v795
  %v851 = vmax.f32 %v563, %v797
  %v852 = vmax.f32 %v564, %v799
  %v853 = vmax.f32 %v565, %v801
  %v854 = vmax.f32 %v566, %v803
  %v855 = vmax.f32 %v567, %v805
  %v856 = vmax.f32 %v568, %v807
  %v857 = vmax.f32 %v569, %v809
  %874 = vrot.lane.b32.xlu0 %v362, 127
  %v875 = vpop.permute.xlu0 %874
  %876 = vrot.lane.b32.xlu0 %v363, 127
  %v877 = vpop.permute.xlu0 %876
  %878 = vrot.lane.b32.xlu0 %v364, 127
  %v879 = vpop.permute.xlu0 %878
  %880 = vrot.lane.b32.xlu0 %v365, 127
  %v881 = vpop.permute.xlu0 %880
  %882 = vrot.lane.b32.xlu0 %v366, 127
  %v883 = vpop.permute.xlu0 %882
  %884 = vrot.lane.b32.xlu0 %v367, 127
  %v885 = vpop.permute.xlu0 %884
  %886 = vrot.lane.b32.xlu0 %v368, 127
  %v887 = vpop.permute.xlu0 %886
  %888 = vrot.lane.b32.xlu0 %v369, 127
  %v889 = vpop.permute.xlu0 %888
  %890 = vrot.lane.b32.xlu0 %v370, 127
  %v891 = vpop.permute.xlu0 %890
  %892 = vrot.lane.b32.xlu0 %v371, 127
  %v893 = vpop.permute.xlu0 %892
  %894 = vrot.lane.b32.xlu0 %v372, 127
  %v895 = vpop.permute.xlu0 %894
  %896 = vrot.lane.b32.xlu0 %v373, 127
  %v897 = vpop.permute.xlu0 %896
  %898 = vrot.lane.b32.xlu0 %v374, 127
  %v899 = vpop.permute.xlu0 %898
  %900 = vrot.lane.b32.xlu0 %v375, 127
  %v901 = vpop.permute.xlu0 %900
  %902 = vrot.lane.b32.xlu0 %v376, 127
  %v903 = vpop.permute.xlu0 %902
  %904 = vrot.lane.b32.xlu0 %v377, 127
  %v905 = vpop.permute.xlu0 %904
  %v922 = vmin.f32 %v650, %v875
  %v923 = vmin.f32 %v651, %v877
  %v924 = vmin.f32 %v652, %v879
  %v925 = vmin.f32 %v653, %v881
  %v926 = vmin.f32 %v654, %v883
  %v927 = vmin.f32 %v655, %v885
  %v928 = vmin.f32 %v656, %v887
  %v929 = vmin.f32 %v657, %v889
  %v930 = vmin.f32 %v658, %v891
  %v931 = vmin.f32 %v659, %v893
  %v932 = vmin.f32 %v660, %v895
  %v933 = vmin.f32 %v661, %v897
  %v934 = vmin.f32 %v662, %v899
  %v935 = vmin.f32 %v663, %v901
  %v936 = vmin.f32 %v664, %v903
  %v937 = vmin.f32 %v665, %v905
  %v938 = vmax.f32 %v650, %v875
  %v939 = vmax.f32 %v651, %v877
  %v940 = vmax.f32 %v652, %v879
  %v941 = vmax.f32 %v653, %v881
  %v942 = vmax.f32 %v654, %v883
  %v943 = vmax.f32 %v655, %v885
  %v944 = vmax.f32 %v656, %v887
  %v945 = vmax.f32 %v657, %v889
  %v946 = vmax.f32 %v658, %v891
  %v947 = vmax.f32 %v659, %v893
  %v948 = vmax.f32 %v660, %v895
  %v949 = vmax.f32 %v661, %v897
  %v950 = vmax.f32 %v662, %v899
  %v951 = vmax.f32 %v663, %v901
  %v952 = vmax.f32 %v664, %v903
  %v953 = vmax.f32 %v665, %v905
  %v954 = vmax.f32 %v442, %v538
  %v955 = vmax.f32 %v443, %v539
  %v956 = vmax.f32 %v444, %v540
  %v957 = vmax.f32 %v445, %v541
  %v958 = vmax.f32 %v446, %v542
  %v959 = vmax.f32 %v447, %v543
  %v960 = vmax.f32 %v448, %v544
  %v961 = vmax.f32 %v449, %v545
  %v962 = vmax.f32 %v450, %v546
  %v963 = vmax.f32 %v451, %v547
  %v964 = vmax.f32 %v452, %v548
  %v965 = vmax.f32 %v453, %v549
  %v966 = vmax.f32 %v454, %v550
  %v967 = vmax.f32 %v455, %v551
  %v968 = vmax.f32 %v456, %v552
  %v969 = vmax.f32 %v457, %v553
  %v970 = vmin.f32 %v842, %v938
  %v971 = vmin.f32 %v843, %v939
  %v972 = vmin.f32 %v844, %v940
  %v973 = vmin.f32 %v845, %v941
  %v974 = vmin.f32 %v846, %v942
  %v975 = vmin.f32 %v847, %v943
  %v976 = vmin.f32 %v848, %v944
  %v977 = vmin.f32 %v849, %v945
  %v978 = vmin.f32 %v850, %v946
  %v979 = vmin.f32 %v851, %v947
  %v980 = vmin.f32 %v852, %v948
  %v981 = vmin.f32 %v853, %v949
  %v982 = vmin.f32 %v854, %v950
  %v983 = vmin.f32 %v855, %v951
  %v984 = vmin.f32 %v856, %v952
  %v985 = vmin.f32 %v857, %v953
  %v986 = vmin.f32 %v826, %v922
  %v987 = vmin.f32 %v827, %v923
  %v988 = vmin.f32 %v828, %v924
  %v989 = vmin.f32 %v829, %v925
  %v990 = vmin.f32 %v830, %v926
  %v991 = vmin.f32 %v831, %v927
  %v992 = vmin.f32 %v832, %v928
  %v993 = vmin.f32 %v833, %v929
  %v994 = vmin.f32 %v834, %v930
  %v995 = vmin.f32 %v835, %v931
  %v996 = vmin.f32 %v836, %v932
  %v997 = vmin.f32 %v837, %v933
  %v998 = vmin.f32 %v838, %v934
  %v999 = vmin.f32 %v839, %v935
  %v1000 = vmin.f32 %v840, %v936
  %v1001 = vmin.f32 %v841, %v937
  %v1002 = vmax.f32 %v826, %v922
  %v1003 = vmax.f32 %v827, %v923
  %v1004 = vmax.f32 %v828, %v924
  %v1005 = vmax.f32 %v829, %v925
  %v1006 = vmax.f32 %v830, %v926
  %v1007 = vmax.f32 %v831, %v927
  %v1008 = vmax.f32 %v832, %v928
  %v1009 = vmax.f32 %v833, %v929
  %v1010 = vmax.f32 %v834, %v930
  %v1011 = vmax.f32 %v835, %v931
  %v1012 = vmax.f32 %v836, %v932
  %v1013 = vmax.f32 %v837, %v933
  %v1014 = vmax.f32 %v838, %v934
  %v1015 = vmax.f32 %v839, %v935
  %v1016 = vmax.f32 %v840, %v936
  %v1017 = vmax.f32 %v841, %v937
  %v1018 = vmax.f32 %v954, %v634
  %v1019 = vmax.f32 %v955, %v635
  %v1020 = vmax.f32 %v956, %v636
  %v1021 = vmax.f32 %v957, %v637
  %v1022 = vmax.f32 %v958, %v638
  %v1023 = vmax.f32 %v959, %v639
  %v1024 = vmax.f32 %v960, %v640
  %v1025 = vmax.f32 %v961, %v641
  %v1026 = vmax.f32 %v962, %v642
  %v1027 = vmax.f32 %v963, %v643
  %v1028 = vmax.f32 %v964, %v644
  %v1029 = vmax.f32 %v965, %v645
  %v1030 = vmax.f32 %v966, %v646
  %v1031 = vmax.f32 %v967, %v647
  %v1032 = vmax.f32 %v968, %v648
  %v1033 = vmax.f32 %v969, %v649
  %v1034 = vmax.f32 %v730, %v986
  %v1035 = vmax.f32 %v731, %v987
  %v1036 = vmax.f32 %v732, %v988
  %v1037 = vmax.f32 %v733, %v989
  %v1038 = vmax.f32 %v734, %v990
  %v1039 = vmax.f32 %v735, %v991
  %v1040 = vmax.f32 %v736, %v992
  %v1041 = vmax.f32 %v737, %v993
  %v1042 = vmax.f32 %v738, %v994
  %v1043 = vmax.f32 %v739, %v995
  %v1044 = vmax.f32 %v740, %v996
  %v1045 = vmax.f32 %v741, %v997
  %v1046 = vmax.f32 %v742, %v998
  %v1047 = vmax.f32 %v743, %v999
  %v1048 = vmax.f32 %v744, %v1000
  %v1049 = vmax.f32 %v745, %v1001
  %v1050 = vmin.f32 %v746, %v970
  %v1051 = vmin.f32 %v747, %v971
  %v1052 = vmin.f32 %v748, %v972
  %v1053 = vmin.f32 %v749, %v973
  %v1054 = vmin.f32 %v750, %v974
  %v1055 = vmin.f32 %v751, %v975
  %v1056 = vmin.f32 %v752, %v976
  %v1057 = vmin.f32 %v753, %v977
  %v1058 = vmin.f32 %v754, %v978
  %v1059 = vmin.f32 %v755, %v979
  %v1060 = vmin.f32 %v756, %v980
  %v1061 = vmin.f32 %v757, %v981
  %v1062 = vmin.f32 %v758, %v982
  %v1063 = vmin.f32 %v759, %v983
  %v1064 = vmin.f32 %v760, %v984
  %v1065 = vmin.f32 %v761, %v985
  %v1066 = vmin.f32 %v1034, %v1002
  %v1067 = vmin.f32 %v1035, %v1003
  %v1068 = vmin.f32 %v1036, %v1004
  %v1069 = vmin.f32 %v1037, %v1005
  %v1070 = vmin.f32 %v1038, %v1006
  %v1071 = vmin.f32 %v1039, %v1007
  %v1072 = vmin.f32 %v1040, %v1008
  %v1073 = vmin.f32 %v1041, %v1009
  %v1074 = vmin.f32 %v1042, %v1010
  %v1075 = vmin.f32 %v1043, %v1011
  %v1076 = vmin.f32 %v1044, %v1012
  %v1077 = vmin.f32 %v1045, %v1013
  %v1078 = vmin.f32 %v1046, %v1014
  %v1079 = vmin.f32 %v1047, %v1015
  %v1080 = vmin.f32 %v1048, %v1016
  %v1081 = vmin.f32 %v1049, %v1017
  %v1082 = vmin.f32 %v1066, %v1050
  %v1083 = vmin.f32 %v1067, %v1051
  %v1084 = vmin.f32 %v1068, %v1052
  %v1085 = vmin.f32 %v1069, %v1053
  %v1086 = vmin.f32 %v1070, %v1054
  %v1087 = vmin.f32 %v1071, %v1055
  %v1088 = vmin.f32 %v1072, %v1056
  %v1089 = vmin.f32 %v1073, %v1057
  %v1090 = vmin.f32 %v1074, %v1058
  %v1091 = vmin.f32 %v1075, %v1059
  %v1092 = vmin.f32 %v1076, %v1060
  %v1093 = vmin.f32 %v1077, %v1061
  %v1094 = vmin.f32 %v1078, %v1062
  %v1095 = vmin.f32 %v1079, %v1063
  %v1096 = vmin.f32 %v1080, %v1064
  %v1097 = vmin.f32 %v1081, %v1065
  %v1098 = vmax.f32 %v1066, %v1050
  %v1099 = vmax.f32 %v1067, %v1051
  %v1100 = vmax.f32 %v1068, %v1052
  %v1101 = vmax.f32 %v1069, %v1053
  %v1102 = vmax.f32 %v1070, %v1054
  %v1103 = vmax.f32 %v1071, %v1055
  %v1104 = vmax.f32 %v1072, %v1056
  %v1105 = vmax.f32 %v1073, %v1057
  %v1106 = vmax.f32 %v1074, %v1058
  %v1107 = vmax.f32 %v1075, %v1059
  %v1108 = vmax.f32 %v1076, %v1060
  %v1109 = vmax.f32 %v1077, %v1061
  %v1110 = vmax.f32 %v1078, %v1062
  %v1111 = vmax.f32 %v1079, %v1063
  %v1112 = vmax.f32 %v1080, %v1064
  %v1113 = vmax.f32 %v1081, %v1065
  %v1114 = vmax.f32 %v1018, %v1082
  %v1115 = vmax.f32 %v1019, %v1083
  %v1116 = vmax.f32 %v1020, %v1084
  %v1117 = vmax.f32 %v1021, %v1085
  %v1118 = vmax.f32 %v1022, %v1086
  %v1119 = vmax.f32 %v1023, %v1087
  %v1120 = vmax.f32 %v1024, %v1088
  %v1121 = vmax.f32 %v1025, %v1089
  %v1122 = vmax.f32 %v1026, %v1090
  %v1123 = vmax.f32 %v1027, %v1091
  %v1124 = vmax.f32 %v1028, %v1092
  %v1125 = vmax.f32 %v1029, %v1093
  %v1126 = vmax.f32 %v1030, %v1094
  %v1127 = vmax.f32 %v1031, %v1095
  %v1128 = vmax.f32 %v1032, %v1096
  %v1129 = vmax.f32 %v1033, %v1097
  %v1130 = vmin.f32 %v1114, %v1098
  %v1131 = vmin.f32 %v1115, %v1099
  %v1132 = vmin.f32 %v1116, %v1100
  %v1133 = vmin.f32 %v1117, %v1101
  %v1134 = vmin.f32 %v1118, %v1102
  %v1135 = vmin.f32 %v1119, %v1103
  %v1136 = vmin.f32 %v1120, %v1104
  %v1137 = vmin.f32 %v1121, %v1105
  %v1138 = vmin.f32 %v1122, %v1106
  %v1139 = vmin.f32 %v1123, %v1107
  %v1140 = vmin.f32 %v1124, %v1108
  %v1141 = vmin.f32 %v1125, %v1109
  %v1142 = vmin.f32 %v1126, %v1110
  %v1143 = vmin.f32 %v1127, %v1111
  %v1144 = vmin.f32 %v1128, %v1112
  %v1145 = vmin.f32 %v1129, %v1113
  %vm1146 = vcmask 113664
  %1147 = vst.msk [vmem:[%s17] sm:$0xff] %vm1146, %v1130
  %vm1148 = vcmask 111616
  %1149 = vst.msk [vmem:[%s17 + $0x8] sm:$0x3f] %vm1148, %v1131
  %1150 = vst.msk [vmem:[%s17 + $0x10] sm:$0xff] %vm1146, %v1132
  %1151 = vst.msk [vmem:[%s17 + $0x18] sm:$0x3f] %vm1148, %v1133
  %1152 = vst.msk [vmem:[%s17 + $0x20] sm:$0xff] %vm1146, %v1134
  %1153 = vst.msk [vmem:[%s17 + $0x28] sm:$0x3f] %vm1148, %v1135
  %1154 = vst.msk [vmem:[%s17 + $0x30] sm:$0xff] %vm1146, %v1136
  %1155 = vst.msk [vmem:[%s17 + $0x38] sm:$0x3f] %vm1148, %v1137
  %1156 = vst.msk [vmem:[%s17 + $0x40] sm:$0xff] %vm1146, %v1138
  %1157 = vst.msk [vmem:[%s17 + $0x48] sm:$0x3f] %vm1148, %v1139
  %1158 = vst.msk [vmem:[%s17 + $0x50] sm:$0xff] %vm1146, %v1140
  %1159 = vst.msk [vmem:[%s17 + $0x58] sm:$0x3f] %vm1148, %v1141
  %1160 = vst.msk [vmem:[%s17 + $0x60] sm:$0xff] %vm1146, %v1142
  %1161 = vst.msk [vmem:[%s17 + $0x68] sm:$0x3f] %vm1148, %v1143
  %1162 = vst.msk [vmem:[%s17 + $0x70] sm:$0xff] %vm1146, %v1144
  %1163 = vst.msk [vmem:[%s17 + $0x78] sm:$0x3f] %vm1148, %v1145
  %s1164 = sadd.s32 0, 0
  %s1165 = smul.u32 2, %s1164
  %p1166 = scmp.lt.s32.totalorder %s1165, 1
  %s1167 = scalar_select %p1166, %s1165, 1
  %s1168 = smul.addr %s1167, 8
  %s1169 = scalar_lea.vmem %s1, %s1168
  // Predicated region
  $region6: #{median_pool2d.1} parent=0 // pred_check
    _
  $region7: #{median_pool2d.1} parent=0 // pred_check_branch
    %1171 = sbr.rel (0) target = $region9
  $region8: #{median_pool2d.1} parent=0 // pred_region
    %s1172 = sadd.s32 0, 0
    %s1173 = smul.u32 2, %s1172
  $region9: #{median_pool2d.1} parent=0 // pred_fallthru
    _
  // Predicated region
  $region10: #{median_pool2d.1} parent=0 // pred_check
    _
  $region11: #{median_pool2d.1} parent=0 // pred_check_branch
    %1175 = sbr.rel (0) target = $region13
  $region12: #{median_pool2d.1} parent=0 // pred_region
    %s1176 = sadd.s32 0, 0
    %s1177 = smul.u32 2, %s1176
    %p1178 = scmp.lt.s32.totalorder %s1177, 1
    %s1179 = scalar_select %p1178, %s1177, 1
    %s1180 = smul.addr %s1179, 8
    %s1181 = scalar_lea.vmem %s1, %s1180
  $region13: #{median_pool2d.1} parent=0 // pred_fallthru
    _
  %1182 = vsyncmov [#allocation3]
  %s1183 = vpop.sfrf %1182
  %p1184 = scmp.eq.s32.totalorder %s1183, 0
  %p1185 = pneg %p1184
  %1187 = shalt.err (%p1185)

</llo_original>
